<compile_context>
chip_gen: v7x
topology: tpu7x:2x2x1
jax: 0.10.0
libtpu: 0.0.40
codegen_flags: <defaults>
</compile_context>

<pallas_src>
import math
from functools import partial

import jax
import jax.numpy as jnp
from jax import lax
from jax.experimental import pallas as pl
from jax.experimental.pallas import tpu as pltpu

HIDDEN = 16
NUM_HEADS = 2
HEAD_DIM = HIDDEN // NUM_HEADS
LN_EPS = 1e-12


def _bert_attention_kernel(x_ref, w_ref, vec_ref, out_ref, *,
                           hidden, num_heads, head_dim):
    """One grid step == one batch element. x_ref: [S, H]."""
    H = hidden

    x = x_ref[...]        # [S, H]
    w = w_ref[...]        # [H, 4H] = [wq^T*scale | wk^T | wv^T | wo^T]
    vec = vec_ref[...]    # [1, 6H] = [bq*scale | bk | bv | bo | gamma | beta]

    # Fused QKV projection (softmax scale folded into the query slice in the wrapper).
    qkv = jnp.dot(x, w[:, :3 * H],
                  preferred_element_type=jnp.float32) + vec[0:1, 0:3 * H]
    wo_t = w[:, 3 * H:4 * H]           # [H, H]
    bo = vec[0:1, 3 * H:4 * H]
    gamma = vec[0:1, 4 * H:5 * H]
    beta = vec[0:1, 5 * H:6 * H]

    # Per-head attention (tiny static head count -> unrolled). No mask needed:
    # the grid already keeps batch elements independent.
    ctx_parts = []
    for h in range(num_heads):
        lo = h * head_dim
        hi = lo + head_dim
        qh = qkv[:, lo:hi]                      # [S, hd]
        kh = qkv[:, H + lo:H + hi]              # [S, hd]
        vh = qkv[:, 2 * H + lo:2 * H + hi]      # [S, hd]

        # q @ k^T without materializing a transposed tile.
        s = lax.dot_general(qh, kh, (((1,), (1,)), ((), ())),
                            preferred_element_type=jnp.float32)  # [S, S]
        s = s - jnp.max(s, axis=-1, keepdims=True)
        p = jnp.exp(s)
        probs = p / jnp.sum(p, axis=-1, keepdims=True)           # exact division
        ctx_parts.append(jnp.dot(probs, vh,
                                 preferred_element_type=jnp.float32))  # [S, hd]

    # Assemble all heads, then one output-dense matmul (instead of per-head
    # dot + serial accumulate).
    ctx = jnp.concatenate(ctx_parts, axis=-1)                    # [S, H]
    y = jnp.dot(ctx, wo_t, preferred_element_type=jnp.float32) + bo + x

    # BertSelfOutput LayerNorm, statistics fused into one pass.
    mean = jnp.mean(y, axis=-1, keepdims=True)
    mean_sq = jnp.mean(y * y, axis=-1, keepdims=True)
    var = mean_sq - mean * mean
    out = (y - mean) * lax.rsqrt(var + LN_EPS) * gamma + beta

    out_ref[...] = out.astype(out_ref.dtype)


def bert_attention(hidden_states, params):
    B, S, H = hidden_states.shape
    assert H == HIDDEN and H % NUM_HEADS == 0

    scale = 1.0 / math.sqrt(HEAD_DIM)

    # Wrapper-side layout plumbing (loop-invariant, free):
    #   one pre-transposed weight slab [H, 4H] and one packed vector row [1, 6H].
    w_pack = jnp.concatenate(
        [params["wq"].T * scale, params["wk"].T, params["wv"].T, params["wo"].T],
        axis=1,
    )
    vec_pack = jnp.concatenate(
        [params["bq"] * scale, params["bk"], params["bv"],
         params["bo"], params["gamma"], params["beta"]]
    )[None, :]

    kernel = partial(_bert_attention_kernel, hidden=H,
                     num_heads=NUM_HEADS, head_dim=HEAD_DIM)

    out = pl.pallas_call(
        kernel,
        out_shape=jax.ShapeDtypeStruct((B, S, H), hidden_states.dtype),
        grid=(B,),
        in_specs=[
            # one batch element per step; batch dim squeezed out of the kernel view
            pl.BlockSpec((None, S, H), lambda b: (b, 0, 0)),
            # weights / packed vectors resident across the grid
            pl.BlockSpec((H, 4 * H), lambda b: (0, 0)),
            pl.BlockSpec((1, 6 * H), lambda b: (0, 0)),
        ],
        out_specs=pl.BlockSpec((None, S, H), lambda b: (b, 0, 0)),
        compiler_params=pltpu.CompilerParams(
            dimension_semantics=("parallel",)),
    )(hidden_states, w_pack, vec_pack)

    return out


def reference_jax(x, p):
    """Pure-JAX reference mirroring the PyTorch module (eval mode)."""
    B, S, H = x.shape
    q = x @ p["wq"].T + p["bq"]
    k = x @ p["wk"].T + p["bk"]
    v = x @ p["wv"].T + p["bv"]

    def split(t):  # [B,S,H] -> [B,nh,S,hd]
        return t.reshape(B, S, NUM_HEADS, HEAD_DIM).transpose(0, 2, 1, 3)

    qh, kh, vh = split(q), split(k), split(v)
    scores = jnp.einsum("bhld,bhrd->bhlr", qh, kh) / math.sqrt(HEAD_DIM)
    probs = jax.nn.softmax(scores, axis=-1)
    ctx = jnp.einsum("bhlr,bhrd->bhld", probs, vh)
    ctx = ctx.transpose(0, 2, 1, 3).reshape(B, S, H)

    y = ctx @ p["wo"].T + p["bo"] + x
    mean = jnp.mean(y, axis=-1, keepdims=True)
    var = jnp.mean((y - mean) ** 2, axis=-1, keepdims=True)
    return (y - mean) / jnp.sqrt(var + LN_EPS) * p["gamma"] + p["beta"]


def make_params(key):
    ks = jax.random.split(key, 8)
    scale = 1.0 / math.sqrt(HIDDEN)
    return {
        "wq": jax.random.normal(ks[0], (HIDDEN, HIDDEN), jnp.float32) * scale,
        "bq": jax.random.normal(ks[1], (HIDDEN,), jnp.float32) * 0.02,
        "wk": jax.random.normal(ks[2], (HIDDEN, HIDDEN), jnp.float32) * scale,
        "bk": jax.random.normal(ks[3], (HIDDEN,), jnp.float32) * 0.02,
        "wv": jax.random.normal(ks[4], (HIDDEN, HIDDEN), jnp.float32) * scale,
        "bv": jax.random.normal(ks[5], (HIDDEN,), jnp.float32) * 0.02,
        "wo": jax.random.normal(ks[6], (HIDDEN, HIDDEN), jnp.float32) * scale,
        "bo": jax.random.normal(ks[7], (HIDDEN,), jnp.float32) * 0.02,
        "gamma": jnp.ones((HIDDEN,), jnp.float32),
        "beta": jnp.zeros((HIDDEN,), jnp.float32),
    }


if __name__ == "__main__":
    key = jax.random.PRNGKey(0)
    k_x, k_p = jax.random.split(key)

    B, S = 2, 8
    hidden_states = jax.random.normal(k_x, (B, S, HIDDEN), jnp.float32)
    params = make_params(k_p)

    out = bert_attention(hidden_states, params)
    out = jax.block_until_ready(out)

    ref = reference_jax(hidden_states, params)
    assert out.shape == (B, S, HIDDEN)
    assert jnp.allclose(out, ref, atol=1e-4, rtol=1e-4), (
        "mismatch vs JAX reference; max abs diff = "
        f"{float(jnp.max(jnp.abs(out - ref)))}"
    )

    print("KERNEL_OK")
</pallas_src>

<mosaic_0001>
module attributes {stable_mosaic.version = 11 : i64} {
  func.func @_bert_attention_kernel(%arg0: i32, %arg1: memref<1x8x16xf32, #tpu.memory_space<vmem>>, %arg2: memref<16x64xf32, #tpu.memory_space<vmem>>, %arg3: memref<1x96xf32, #tpu.memory_space<vmem>>, %arg4: memref<1x8x16xf32, #tpu.memory_space<vmem>>) attributes {dimension_semantics = [#tpu.dimension_semantics<parallel>], iteration_bounds = array<i64: 2>, scalar_prefetch = 0 : i64, scratch_operands = 0 : i64, tpu.core_type = #tpu.core_type<tc>, window_params = [{transform_indices = @transform_0, window_bounds = array<i64: 1, 8, 16>}, {pipeline_mode = #tpu.pipeline_mode<synchronous>, transform_indices = @transform_1, window_bounds = array<i64: 16, 64>}, {pipeline_mode = #tpu.pipeline_mode<synchronous>, transform_indices = @transform_2, window_bounds = array<i64: 1, 96>}, {transform_indices = @transform_3, window_bounds = array<i64: 1, 8, 16>}]} {
    %c0 = arith.constant 0 : index
    %c0_0 = arith.constant 0 : index
    %c0_1 = arith.constant 0 : index
    %0 = vector.load %arg1[%c0, %c0_0, %c0_1] : memref<1x8x16xf32, #tpu.memory_space<vmem>>, vector<1x8x16xf32>
    %1 = vector.shape_cast %0 : vector<1x8x16xf32> to vector<8x16xf32>
    %c0_2 = arith.constant 0 : index
    %c0_3 = arith.constant 0 : index
    %2 = vector.load %arg2[%c0_2, %c0_3] : memref<16x64xf32, #tpu.memory_space<vmem>>, vector<16x64xf32>
    %c0_4 = arith.constant 0 : index
    %c0_5 = arith.constant 0 : index
    %3 = vector.load %arg3[%c0_4, %c0_5] : memref<1x96xf32, #tpu.memory_space<vmem>>, vector<1x96xf32>
    %4 = vector.extract_strided_slice %2 {offsets = [0, 0], sizes = [16, 48], strides = [1, 1]} : vector<16x64xf32> to vector<16x48xf32>
    %cst = arith.constant dense<0.000000e+00> : vector<8x48xf32>
    %5 = tpu.matmul %1, %4, %cst {dimension_numbers = #tpu.dot_dimension_numbers<[1], [0], [0], [1], [0, 0, 1, 1], [], []>} : vector<8x16xf32>, vector<16x48xf32>, vector<8x48xf32> -> vector<8x48xf32>
    %6 = vector.extract_strided_slice %3 {offsets = [0, 0], sizes = [1, 48], strides = [1, 1]} : vector<1x96xf32> to vector<1x48xf32>
    %7 = vector.broadcast %6 : vector<1x48xf32> to vector<8x48xf32>
    %8 = arith.addf %5, %7 : vector<8x48xf32>
    %9 = vector.extract_strided_slice %2 {offsets = [0, 48], sizes = [16, 16], strides = [1, 1]} : vector<16x64xf32> to vector<16x16xf32>
    %10 = vector.extract_strided_slice %3 {offsets = [0, 48], sizes = [1, 16], strides = [1, 1]} : vector<1x96xf32> to vector<1x16xf32>
    %11 = vector.extract_strided_slice %3 {offsets = [0, 64], sizes = [1, 16], strides = [1, 1]} : vector<1x96xf32> to vector<1x16xf32>
    %12 = vector.extract_strided_slice %3 {offsets = [0, 80], sizes = [1, 16], strides = [1, 1]} : vector<1x96xf32> to vector<1x16xf32>
    %13 = vector.extract_strided_slice %8 {offsets = [0, 0], sizes = [8, 8], strides = [1, 1]} : vector<8x48xf32> to vector<8x8xf32>
    %14 = vector.extract_strided_slice %8 {offsets = [0, 16], sizes = [8, 8], strides = [1, 1]} : vector<8x48xf32> to vector<8x8xf32>
    %15 = vector.extract_strided_slice %8 {offsets = [0, 32], sizes = [8, 8], strides = [1, 1]} : vector<8x48xf32> to vector<8x8xf32>
    %cst_6 = arith.constant dense<0.000000e+00> : vector<8x8xf32>
    %16 = tpu.matmul %13, %14, %cst_6 {dimension_numbers = #tpu.dot_dimension_numbers<[1], [1], [0], [0], [0, 0, 1, 0], [], []>} : vector<8x8xf32>, vector<8x8xf32>, vector<8x8xf32> -> vector<8x8xf32>
    %cst_7 = arith.constant dense<0xFF800000> : vector<8xf32>
    %17 = vector.multi_reduction <maximumf>, %16, %cst_7 [1] : vector<8x8xf32> to vector<8xf32>
    %18 = vector.shape_cast %17 : vector<8xf32> to vector<8x1xf32>
    %19 = vector.broadcast %18 : vector<8x1xf32> to vector<8x8xf32>
    %20 = arith.subf %16, %19 : vector<8x8xf32>
    %21 = math.exp %20 : vector<8x8xf32>
    %cst_8 = arith.constant dense<0.000000e+00> : vector<8xf32>
    %22 = vector.multi_reduction <add>, %21, %cst_8 [1] : vector<8x8xf32> to vector<8xf32>
    %23 = vector.shape_cast %22 : vector<8xf32> to vector<8x1xf32>
    %24 = vector.broadcast %23 : vector<8x1xf32> to vector<8x8xf32>
    %25 = arith.divf %21, %24 : vector<8x8xf32>
    %cst_9 = arith.constant dense<0.000000e+00> : vector<8x8xf32>
    %26 = tpu.matmul %25, %15, %cst_9 {dimension_numbers = #tpu.dot_dimension_numbers<[1], [0], [0], [1], [0, 0, 1, 1], [], []>} : vector<8x8xf32>, vector<8x8xf32>, vector<8x8xf32> -> vector<8x8xf32>
    %27 = vector.extract_strided_slice %8 {offsets = [0, 8], sizes = [8, 8], strides = [1, 1]} : vector<8x48xf32> to vector<8x8xf32>
    %28 = vector.extract_strided_slice %8 {offsets = [0, 24], sizes = [8, 8], strides = [1, 1]} : vector<8x48xf32> to vector<8x8xf32>
    %29 = vector.extract_strided_slice %8 {offsets = [0, 40], sizes = [8, 8], strides = [1, 1]} : vector<8x48xf32> to vector<8x8xf32>
    %cst_10 = arith.constant dense<0.000000e+00> : vector<8x8xf32>
    %30 = tpu.matmul %27, %28, %cst_10 {dimension_numbers = #tpu.dot_dimension_numbers<[1], [1], [0], [0], [0, 0, 1, 0], [], []>} : vector<8x8xf32>, vector<8x8xf32>, vector<8x8xf32> -> vector<8x8xf32>
    %cst_11 = arith.constant dense<0xFF800000> : vector<8xf32>
    %31 = vector.multi_reduction <maximumf>, %30, %cst_11 [1] : vector<8x8xf32> to vector<8xf32>
    %32 = vector.shape_cast %31 : vector<8xf32> to vector<8x1xf32>
    %33 = vector.broadcast %32 : vector<8x1xf32> to vector<8x8xf32>
    %34 = arith.subf %30, %33 : vector<8x8xf32>
    %35 = math.exp %34 : vector<8x8xf32>
    %cst_12 = arith.constant dense<0.000000e+00> : vector<8xf32>
    %36 = vector.multi_reduction <add>, %35, %cst_12 [1] : vector<8x8xf32> to vector<8xf32>
    %37 = vector.shape_cast %36 : vector<8xf32> to vector<8x1xf32>
    %38 = vector.broadcast %37 : vector<8x1xf32> to vector<8x8xf32>
    %39 = arith.divf %35, %38 : vector<8x8xf32>
    %cst_13 = arith.constant dense<0.000000e+00> : vector<8x8xf32>
    %40 = tpu.matmul %39, %29, %cst_13 {dimension_numbers = #tpu.dot_dimension_numbers<[1], [0], [0], [1], [0, 0, 1, 1], [], []>} : vector<8x8xf32>, vector<8x8xf32>, vector<8x8xf32> -> vector<8x8xf32>
    %41 = tpu.concatenate %26, %40 in 1 : vector<8x8xf32>, vector<8x8xf32> -> vector<8x16xf32>
    %cst_14 = arith.constant dense<0.000000e+00> : vector<8x16xf32>
    %42 = tpu.matmul %41, %9, %cst_14 {dimension_numbers = #tpu.dot_dimension_numbers<[1], [0], [0], [1], [0, 0, 1, 1], [], []>} : vector<8x16xf32>, vector<16x16xf32>, vector<8x16xf32> -> vector<8x16xf32>
    %43 = vector.broadcast %10 : vector<1x16xf32> to vector<8x16xf32>
    %44 = arith.addf %42, %43 : vector<8x16xf32>
    %45 = arith.addf %44, %1 : vector<8x16xf32>
    %cst_15 = arith.constant dense<0.000000e+00> : vector<8xf32>
    %46 = vector.multi_reduction <add>, %45, %cst_15 [1] : vector<8x16xf32> to vector<8xf32>
    %47 = vector.shape_cast %46 : vector<8xf32> to vector<8x1xf32>
    %cst_16 = arith.constant 1.600000e+01 : f32
    %48 = vector.broadcast %cst_16 : f32 to vector<8x1xf32>
    %49 = arith.divf %47, %48 : vector<8x1xf32>
    %50 = arith.mulf %45, %45 : vector<8x16xf32>
    %cst_17 = arith.constant dense<0.000000e+00> : vector<8xf32>
    %51 = vector.multi_reduction <add>, %50, %cst_17 [1] : vector<8x16xf32> to vector<8xf32>
    %52 = vector.shape_cast %51 : vector<8xf32> to vector<8x1xf32>
    %cst_18 = arith.constant 1.600000e+01 : f32
    %53 = vector.broadcast %cst_18 : f32 to vector<8x1xf32>
    %54 = arith.divf %52, %53 : vector<8x1xf32>
    %55 = arith.mulf %49, %49 : vector<8x1xf32>
    %56 = arith.subf %54, %55 : vector<8x1xf32>
    %57 = vector.broadcast %49 : vector<8x1xf32> to vector<8x16xf32>
    %58 = arith.subf %45, %57 : vector<8x16xf32>
    %cst_19 = arith.constant 9.99999996E-13 : f32
    %59 = vector.broadcast %cst_19 : f32 to vector<8x1xf32>
    %60 = arith.addf %56, %59 : vector<8x1xf32>
    %61 = math.rsqrt %60 : vector<8x1xf32>
    %62 = vector.broadcast %61 : vector<8x1xf32> to vector<8x16xf32>
    %63 = arith.mulf %58, %62 : vector<8x16xf32>
    %64 = vector.broadcast %11 : vector<1x16xf32> to vector<8x16xf32>
    %65 = arith.mulf %63, %64 : vector<8x16xf32>
    %66 = vector.broadcast %12 : vector<1x16xf32> to vector<8x16xf32>
    %67 = arith.addf %65, %66 : vector<8x16xf32>
    %c0_20 = arith.constant 0 : index
    %c0_21 = arith.constant 0 : index
    %c0_22 = arith.constant 0 : index
    %68 = vector.load %arg4[%c0_20, %c0_21, %c0_22] : memref<1x8x16xf32, #tpu.memory_space<vmem>>, vector<1x8x16xf32>
    %69 = vector.shape_cast %68 : vector<1x8x16xf32> to vector<8x16xf32>
    %70 = vector.shape_cast %67 : vector<8x16xf32> to vector<1x8x16xf32>
    tpu.vector_store %arg4[%c0_20, %c0_21, %c0_22], %70 {strides = array<i32>} : memref<1x8x16xf32, #tpu.memory_space<vmem>>, vector<1x8x16xf32>,
    return
  }
  func.func @transform_0(%arg0: i32) -> (i32, i32, i32) {
    %c0_i32 = arith.constant 0 : i32
    %c0_i32_0 = arith.constant 0 : i32
    %c0_i32_1 = arith.constant 0 : i32
    return %arg0, %c0_i32, %c0_i32_0 : i32, i32, i32
  }
  func.func @transform_1(%arg0: i32) -> (i32, i32) {
    %c0_i32 = arith.constant 0 : i32
    %c0_i32_0 = arith.constant 0 : i32
    %c0_i32_1 = arith.constant 0 : i32
    return %c0_i32, %c0_i32_0 : i32, i32
  }
  func.func @transform_2(%arg0: i32) -> (i32, i32) {
    %c0_i32 = arith.constant 0 : i32
    %c0_i32_0 = arith.constant 0 : i32
    %c0_i32_1 = arith.constant 0 : i32
    return %c0_i32, %c0_i32_0 : i32, i32
  }
  func.func @transform_3(%arg0: i32) -> (i32, i32, i32) {
    %c0_i32 = arith.constant 0 : i32
    %c0_i32_0 = arith.constant 0 : i32
    %c0_i32_1 = arith.constant 0 : i32
    return %arg0, %c0_i32, %c0_i32_0 : i32, i32, i32
  }
}

</mosaic_0001>

<llo_original>
// kernel: tpu_custom_call.1
$region0: #{tpu_custom_call.1}
  #allocation0 [shape = 'u32[]', space=smem, size = 0x4, offset = 0x4, fixed_abs, tag = 'smem constant byte address 0x4 - core index']
  #allocation1 [shape = 'u32[144,128]{1,0:T(1,128)}', space=vmem, size = 0x12000, scoped, tag = 'internal scratch']
  %s0 = inlined_call_operand.hbm [shape: f32[2,8,16], index: 0, kind: input, shape index: {}]
  %s1 = inlined_call_operand.hbm [shape: f32[16,64], index: 1, kind: input, shape index: {}]
  %s2 = inlined_call_operand.vmem [shape: f32[1,96], index: 2, kind: input, shape index: {}]
  %s3 = inlined_call_operand.hbm [shape: f32[2,8,16], index: 3, kind: output, shape index: {}]
  %s4 = sld [smem:[#allocation0]]
  $region53: #{tpu_custom_call.1} parent=0
    _
  %s6 = ssub.s32 1, %s4
  %s7 = scalar_select 0, %s6, %s4
  $region1: #{tpu_custom_call.1} parent=0
    #allocation2 [shape = 'u8[8192]{0}', space=vmem, size = 0x2000, scoped, tag = 'input window, operand 0']
    #allocation3 [shape = 's32[2]{0}', space=sflag, size = 0x8, scoped, tag = 'scoped memory for tpu_custom_call.1']
    #allocation4 [shape = 's32[2]{0}', space=sflag, size = 0x8, scoped, tag = 'scoped memory for tpu_custom_call.1']
    #allocation5 [shape = 'u8[8192]{0}', space=vmem, size = 0x2000, scoped, tag = 'input window, operand 1, single buffered']
    #allocation6 [shape = 's32[1]{0}', space=sflag, size = 0x4, scoped, tag = 'scoped memory for tpu_custom_call.1']
    #allocation7 [shape = 'u8[8192]{0}', space=vmem, size = 0x2000, scoped, tag = 'output window, operand 0']
    %8 = vsyncpa [#allocation3], 0
    %s9 = scalar_lea.sflag [#allocation3], 1
    %10 = vsyncpa %s9, 0
    %11 = vsyncpa [#allocation6], 0
    %12 = vsyncpa [#allocation4], 0
    %s13 = scalar_lea.sflag [#allocation4], 1
    %14 = vsyncpa %s13, 0
    loop: start=0, step=1, limit=4
    $region2: #{tpu_custom_call.1} parent=1 // loop_pre_header
      _
    $region3: #{tpu_custom_call.1} parent=1 // loop_header
      %s16 = sphi 0, %s20
      %p17 = scmp.ge.s32.totalorder %s16, 4
      %s26 = sphi 0, %s28
      %s29 = sphi 0, %s26
      %s30 = sphi 0, %s29
      %s46 = sphi 0, %s30
      %s50 = sphi 0, %s50
      %s52 = sphi 0, %s50
      %s53 = sphi 0, %s52
      %s67 = sphi 0, %s53
      %s71 = sphi 0, %s71
      %s73 = sphi 0, %s71
      %s74 = sphi 0, %s73
      %s88 = sphi 0, %s74
      %s94 = sphi 0, %s96
      %s97 = sphi 0, %s94
      %s98 = sphi 0, %s97
      %s114 = sphi 0, %s98
    $region4: #{tpu_custom_call.1} parent=1 // loop_header_branch
      %19 = sbr.rel (%p17) target = $region8
    $region5: #{tpu_custom_call.1} parent=1 // loop_body
      %s21 = ssub.s32 %s16, 1
      %s22 = ssub.s32 %s16, 2
      %s23 = sadd.s32 %s16, 1
      %s24 = ssub.s32 %s16, %s23
      %p25 = scmp.eq.s32.totalorder %s24, 0
      %s27 = sadd.s32 %s26, 1
      %s28 = scalar_select %p25, %s26, %s27
      %p31 = pneg %p25
      %p32 = scmp.eq.s32.totalorder %s16, 1
      %p33 = por %p31, %p32
      %p34 = scmp.ne.s32.totalorder %s26, %s29
      %p35 = scmp.eq.s32.totalorder %s16, 0
      %p36 = por %p34, %p35
      %p37 = scmp.ne.s32.totalorder %s26, %s29
      %p38 = scmp.eq.s32.totalorder %s21, 1
      %p39 = por %p37, %p38
      %p40 = scmp.ne.s32.totalorder %s29, %s30
      %p41 = scmp.eq.s32.totalorder %s21, 0
      %p42 = por %p40, %p41
      %p43 = scmp.ne.s32.totalorder %s29, %s30
      %p44 = scmp.eq.s32.totalorder %s22, 1
      %p45 = por %p43, %p44
      %p47 = scmp.ne.s32.totalorder %s30, %s46
      %p48 = scmp.eq.s32.totalorder %s22, 0
      %p49 = por %p47, %p48
      %s51 = sadd.s32 %s50, 1
      %p54 = scmp.eq.s32.totalorder %s16, 1
      %p55 = scmp.ne.s32.totalorder %s50, %s52
      %p56 = scmp.eq.s32.totalorder %s16, 0
      %p57 = por %p55, %p56
      %p58 = scmp.ne.s32.totalorder %s50, %s52
      %p59 = scmp.eq.s32.totalorder %s21, 1
      %p60 = por %p58, %p59
      %p61 = scmp.ne.s32.totalorder %s52, %s53
      %p62 = scmp.eq.s32.totalorder %s21, 0
      %p63 = por %p61, %p62
      %p64 = scmp.ne.s32.totalorder %s52, %s53
      %p65 = scmp.eq.s32.totalorder %s22, 1
      %p66 = por %p64, %p65
      %p68 = scmp.ne.s32.totalorder %s53, %s67
      %p69 = scmp.eq.s32.totalorder %s22, 0
      %p70 = por %p68, %p69
      %s72 = sadd.s32 %s71, 1
      %p75 = scmp.eq.s32.totalorder %s16, 1
      %p76 = scmp.ne.s32.totalorder %s71, %s73
      %p77 = scmp.eq.s32.totalorder %s16, 0
      %p78 = por %p76, %p77
      %p79 = scmp.ne.s32.totalorder %s71, %s73
      %p80 = scmp.eq.s32.totalorder %s21, 1
      %p81 = por %p79, %p80
      %p82 = scmp.ne.s32.totalorder %s73, %s74
      %p83 = scmp.eq.s32.totalorder %s21, 0
      %p84 = por %p82, %p83
      %p85 = scmp.ne.s32.totalorder %s73, %s74
      %p86 = scmp.eq.s32.totalorder %s22, 1
      %p87 = por %p85, %p86
      %p89 = scmp.ne.s32.totalorder %s74, %s88
      %p90 = scmp.eq.s32.totalorder %s22, 0
      %p91 = por %p89, %p90
      %s92 = ssub.s32 %s16, %s23
      %p93 = scmp.eq.s32.totalorder %s92, 0
      %s95 = sadd.s32 %s94, 1
      %s96 = scalar_select %p93, %s94, %s95
      %p99 = pneg %p93
      %p100 = scmp.eq.s32.totalorder %s16, 1
      %p101 = por %p99, %p100
      %p102 = scmp.ne.s32.totalorder %s94, %s97
      %p103 = scmp.eq.s32.totalorder %s16, 0
      %p104 = por %p102, %p103
      %p105 = scmp.ne.s32.totalorder %s94, %s97
      %p106 = scmp.eq.s32.totalorder %s21, 1
      %p107 = por %p105, %p106
      %p108 = scmp.ne.s32.totalorder %s97, %s98
      %p109 = scmp.eq.s32.totalorder %s21, 0
      %p110 = por %p108, %p109
      %p111 = scmp.ne.s32.totalorder %s97, %s98
      %p112 = scmp.eq.s32.totalorder %s22, 1
      %p113 = por %p111, %p112
      %p115 = scmp.ne.s32.totalorder %s98, %s114
      %p116 = scmp.eq.s32.totalorder %s22, 0
      %p117 = por %p115, %p116
      %p118 = scmp.le.s32.totalorder 1, %s16
      %p119 = scmp.lt.s32.totalorder %s16, 3
      %p120 = pnand %p118, %p119
      %p121 = pneg %p120
      // Predicated region
      $region9: #{tpu_custom_call.1} parent=5 // pred_check
        _
      $region10: #{tpu_custom_call.1} parent=5 // pred_check_branch
        %123 = sbr.rel (%p120) target = $region12
      $region11: #{tpu_custom_call.1} parent=5 // pred_region
        %s124 = ssub.s32 %s16, 1
        // Predicated region
        $region13: #{tpu_custom_call.1} parent=11 // pred_check
          %p125 = pneg %p63
        $region14: #{tpu_custom_call.1} parent=11 // pred_check_branch
          %127 = sbr.rel (%p125) target = $region16
        $region15: #{tpu_custom_call.1} parent=11 // pred_region
          %s129 = ssub.s32 256, 256
          %130 = vsyncadd [#allocation6], %s129
          %s131 = sshll.u32 [#allocation5], 4
          %s132 = int_to_ptr.vmem [resolvable:$true] %s131
          %137 = dma.hbm_to_vmem [thread:$0]  %s1, 256, %s132, [#allocation6], 128, 128, 8
        $region16: #{tpu_custom_call.1} parent=11 // pred_fallthru
          _
        // Predicated region
        $region17: #{tpu_custom_call.1} parent=11 // pred_check
          %p138 = pneg %p84
        $region18: #{tpu_custom_call.1} parent=11 // pred_check_branch
          %140 = sbr.rel (%p138) target = $region20
        $region19: #{tpu_custom_call.1} parent=11 // pred_region
          _
        $region20: #{tpu_custom_call.1} parent=11 // pred_fallthru
          _
      $region12: #{tpu_custom_call.1} parent=5 // pred_fallthru
        _
      %p141 = scmp.lt.s32.totalorder %s16, 2
      // Predicated region
      $region21: #{tpu_custom_call.1} parent=5 // pred_check
        %p142 = pneg %p141
      $region22: #{tpu_custom_call.1} parent=5 // pred_check_branch
        %144 = sbr.rel (%p142) target = $region24
      $region23: #{tpu_custom_call.1} parent=5 // pred_region
        // Predicated region
        $region25: #{tpu_custom_call.1} parent=23 // pred_check
          %p145 = pneg %p36
        $region26: #{tpu_custom_call.1} parent=23 // pred_check_branch
          %147 = sbr.rel (%p145) target = $region28
        $region27: #{tpu_custom_call.1} parent=23 // pred_region
          %s148 = sand.u32 %s26, 1
          %s149 = scalar_lea.sflag [#allocation3], %s148
          %s150 = sand.u32 %s26, 1
          %s151 = smul.addr %s150, 8
          %s152 = scalar_lea.vmem [#allocation2], %s151
          %s154 = ssub.s32 128, 128
          %155 = vsyncadd %s149, %s154
          %s156 = smul.addr %s16, 128
          %s157 = scalar_lea.hbm %s0, %s156
          %s159 = sshll.u32 %s152, 4
          %s160 = int_to_ptr.vmem [resolvable:$true] %s159
          %162 = dma.hbm_to_vmem [thread:$0]  %s157, 128, %s160, %s149
        $region28: #{tpu_custom_call.1} parent=23 // pred_fallthru
          _
      $region24: #{tpu_custom_call.1} parent=5 // pred_fallthru
        _
      %p163 = scmp.le.s32.totalorder 1, %s16
      %p164 = scmp.lt.s32.totalorder %s16, 3
      %p165 = pnand %p163, %p164
      %p166 = pneg %p165
      // Predicated region
      $region29: #{tpu_custom_call.1} parent=5 // pred_check
        _
      $region30: #{tpu_custom_call.1} parent=5 // pred_check_branch
        %168 = sbr.rel (%p165) target = $region32
      $region31: #{tpu_custom_call.1} parent=5 // pred_region
        %s169 = ssub.s32 %s16, 1
        %s170 = sand.u32 %s29, 1
        %s171 = scalar_lea.sflag [#allocation3], %s170
        %s172 = sand.u32 %s29, 1
        %s173 = smul.addr %s172, 8
        %s174 = scalar_lea.vmem [#allocation2], %s173
        // Predicated region
        $region33: #{tpu_custom_call.1} parent=31 // pred_check
          %p175 = pneg %p42
        $region34: #{tpu_custom_call.1} parent=31 // pred_check_branch
          %177 = sbr.rel (%p175) target = $region36
        $region35: #{tpu_custom_call.1} parent=31 // pred_region
          %178 = dma.done %s171, 128
        $region36: #{tpu_custom_call.1} parent=31 // pred_fallthru
          _
        // Predicated region
        $region37: #{tpu_custom_call.1} parent=31 // pred_check
          %p179 = pneg %p63
        $region38: #{tpu_custom_call.1} parent=31 // pred_check_branch
          %181 = sbr.rel (%p179) target = $region40
        $region39: #{tpu_custom_call.1} parent=31 // pred_region
          %182 = dma.done [#allocation6], 256
        $region40: #{tpu_custom_call.1} parent=31 // pred_fallthru
          _
        %s183 = sand.u32 %s29, 1
        %s184 = scalar_lea.sflag [#allocation3], %s183
        %s185 = sand.u32 %s29, 1
        %s186 = smul.addr %s185, 8
        %s187 = scalar_lea.vmem [#allocation2], %s186
        %p188 = pneg %p42
        %p189 = pneg %p39
        %p190 = pneg %p63
        %p191 = pneg %p60
        %p192 = pneg %p84
        %p193 = pneg %p81
        %p194 = pneg %p110
        %p195 = pneg %p107
        %s196 = sand.u32 %s97, 1
        %s197 = scalar_lea.sflag [#allocation4], %s196
        %s198 = sand.u32 %s97, 1
        %s199 = smul.addr %s198, 8
        %s200 = scalar_lea.vmem [#allocation7], %s199
        %v201 = vld [vmem:[%s174] sm:$0xff]
        %v202 = vld [vmem:[#allocation5] sm:$0xff]
        %v203 = vld [vmem:[#allocation5 + $0x8] sm:$0xff]
        %v204 = vld [vmem:[%s2] sm:$0x1]
        %v206 = vlaneseq
        %v207 = vshrl.u32 %v206, 7
        %v208 = vsub.s32 0, %v207
        %v209 = vrot.slane %v204, %v208
        %vm211 = vcmask 130048
        %v213 = vsel %vm211, %v201, 0
        %215 = vmatprep.subr.mxu0 0.0
        %216 = vmatpush1.msra.mxu0 %v202
        %217 = vmatprep.subr.mxu0 0.0
        %218 = vmatpush1.msra.mxu0 %v203
        %219 = vmatprep.subr.mxu0 0.0
        %220 = vmatpush1.msra.mxu0 0.0
        %221 = vmatprep.subr.mxu0 0.0
        %222 = vmatpush1.msra.mxu0 0.0
        %223 = vmatprep.subr.mxu0 0.0
        %224 = vmatpush1.msra.mxu0 0.0
        %225 = vmatprep.subr.mxu0 0.0
        %226 = vmatpush1.msra.mxu0 0.0
        %227 = vmatprep.subr.mxu0 0.0
        %228 = vmatpush1.msra.mxu0 0.0
        %229 = vmatprep.subr.mxu0 0.0
        %230 = vmatpush1.msra.mxu0 0.0
        %231 = vmatprep.subr.mxu0 0.0
        %232 = vmatpush1.msra.mxu0 0.0
        %233 = vmatprep.subr.mxu0 0.0
        %234 = vmatpush1.msra.mxu0 0.0
        %235 = vmatprep.subr.mxu0 0.0
        %236 = vmatpush1.msra.mxu0 0.0
        %237 = vmatprep.subr.mxu0 0.0
        %238 = vmatpush1.msra.mxu0 0.0
        %239 = vmatprep.subr.mxu0 0.0
        %240 = vmatpush1.msra.mxu0 0.0
        %241 = vmatprep.subr.mxu0 0.0
        %242 = vmatpush1.msra.mxu0 0.0
        %243 = vmatprep.subr.mxu0 0.0
        %244 = vmatpush1.msra.mxu0 0.0
        %245 = vmatprep.subr.mxu0 0.0
        %246 = vmatpush1.msra.mxu0 0.0
        %247 = vmatprep.subr.mxu0 0.0
        %248 = vmatpush1.msra.mxu0 0.0
        %249 = vmatprep.subr.mxu0 0.0
        %250 = vmatpush1.msra.mxu0 0.0
        %251 = vmatprep.subr.mxu0 0.0
        %252 = vmatpush1.msra.mxu0 0.0
        %253 = vmatprep.subr.mxu0 0.0
        %254 = vmatpush1.msra.mxu0 0.0
        %255 = vmatprep.subr.mxu0 0.0
        %256 = vmatpush1.msra.mxu0 0.0
        %257 = vmatprep.subr.mxu0 0.0
        %258 = vmatpush1.msra.mxu0 0.0
        %259 = vmatprep.subr.mxu0 0.0
        %260 = vmatpush1.msra.mxu0 0.0
        %261 = vmatprep.subr.mxu0 0.0
        %262 = vmatpush1.msra.mxu0 0.0
        %263 = vmatprep.subr.mxu0 0.0
        %264 = vmatpush1.msra.mxu0 0.0
        %265 = vmatprep.subr.mxu0 0.0
        %266 = vmatpush1.msra.mxu0 0.0
        %267 = vmatprep.subr.mxu0 0.0
        %268 = vmatpush1.msra.mxu0 0.0
        %269 = vmatprep.subr.mxu0 0.0
        %270 = vmatpush1.msra.mxu0 0.0
        %271 = vmatprep.subr.mxu0 0.0
        %272 = vmatpush1.msra.mxu0 0.0
        %273 = vmatprep.subr.mxu0 0.0
        %274 = vmatpush1.msra.mxu0 0.0
        %275 = vmatprep.subr.mxu0 0.0
        %276 = vmatpush1.msra.mxu0 0.0
        %277 = vmatprep.subr.mxu0 0.0
        %278 = vmatpush1.msra.mxu0 0.0
        %279 = vmatprep.mubr.f32.mxu0 0.0
        %280 = vmatmul.mubr.f32.gmra.mrb[0].mxu0 %v213
        %v281 = vpop.f32.mrb[0].mxu0
        %v282 = vadd.f32 %v209, %v281
        %v283 = vpop.f32.mrb[0].mxu0
        %284 = vdwg.mxu0
        %286 = vrot.lane.b32.xlu0 %v282, 112
        %v287 = vpop.permute.xlu0 %286
        %vm288 = vcmask 64512
        %v289 = vsel %vm288, %v282, 0
        %v291 = vsel %vm288, %v287, 0
        %293 = vmatprep.subr.mxu0 0.0
        %294 = vmatpush1.xpose.msra.mxu0 %v291
        %295 = vmatprep.subr.mxu0 0.0
        %296 = vmatpush1.xpose.msra.mxu0 0.0
        %297 = vmatprep.subr.mxu0 0.0
        %298 = vmatpush1.xpose.msra.mxu0 0.0
        %299 = vmatprep.subr.mxu0 0.0
        %300 = vmatpush1.xpose.msra.mxu0 0.0
        %301 = vmatprep.subr.mxu0 0.0
        %302 = vmatpush1.xpose.msra.mxu0 0.0
        %303 = vmatprep.subr.mxu0 0.0
        %304 = vmatpush1.xpose.msra.mxu0 0.0
        %305 = vmatprep.subr.mxu0 0.0
        %306 = vmatpush1.xpose.msra.mxu0 0.0
        %307 = vmatprep.subr.mxu0 0.0
        %308 = vmatpush1.xpose.msra.mxu0 0.0
        %309 = vmatprep.subr.mxu0 0.0
        %310 = vmatpush1.xpose.msra.mxu0 0.0
        %311 = vmatprep.subr.mxu0 0.0
        %312 = vmatpush1.xpose.msra.mxu0 0.0
        %313 = vmatprep.subr.mxu0 0.0
        %314 = vmatpush1.xpose.msra.mxu0 0.0
        %315 = vmatprep.subr.mxu0 0.0
        %316 = vmatpush1.xpose.msra.mxu0 0.0
        %317 = vmatprep.subr.mxu0 0.0
        %318 = vmatpush1.xpose.msra.mxu0 0.0
        %319 = vmatprep.subr.mxu0 0.0
        %320 = vmatpush1.xpose.msra.mxu0 0.0
        %321 = vmatprep.subr.mxu0 0.0
        %322 = vmatpush1.xpose.msra.mxu0 0.0
        %323 = vmatprep.subr.mxu0 0.0
        %324 = vmatpush1.xpose.msra.mxu0 0.0
        %325 = vmatprep.subr.mxu0 0.0
        %326 = vmatpush1.xpose.msra.mxu0 0.0
        %327 = vmatprep.subr.mxu0 0.0
        %328 = vmatpush1.xpose.msra.mxu0 0.0
        %329 = vmatprep.subr.mxu0 0.0
        %330 = vmatpush1.xpose.msra.mxu0 0.0
        %331 = vmatprep.subr.mxu0 0.0
        %332 = vmatpush1.xpose.msra.mxu0 0.0
        %333 = vmatprep.subr.mxu0 0.0
        %334 = vmatpush1.xpose.msra.mxu0 0.0
        %335 = vmatprep.subr.mxu0 0.0
        %336 = vmatpush1.xpose.msra.mxu0 0.0
        %337 = vmatprep.subr.mxu0 0.0
        %338 = vmatpush1.xpose.msra.mxu0 0.0
        %339 = vmatprep.subr.mxu0 0.0
        %340 = vmatpush1.xpose.msra.mxu0 0.0
        %341 = vmatprep.subr.mxu0 0.0
        %342 = vmatpush1.xpose.msra.mxu0 0.0
        %343 = vmatprep.subr.mxu0 0.0
        %344 = vmatpush1.xpose.msra.mxu0 0.0
        %345 = vmatprep.subr.mxu0 0.0
        %346 = vmatpush1.xpose.msra.mxu0 0.0
        %347 = vmatprep.subr.mxu0 0.0
        %348 = vmatpush1.xpose.msra.mxu0 0.0
        %349 = vmatprep.subr.mxu0 0.0
        %350 = vmatpush1.xpose.msra.mxu0 0.0
        %351 = vmatprep.subr.mxu0 0.0
        %352 = vmatpush1.xpose.msra.mxu0 0.0
        %353 = vmatprep.subr.mxu0 0.0
        %354 = vmatpush1.xpose.msra.mxu0 0.0
        %355 = vmatprep.subr.mxu0 0.0
        %356 = vmatpush1.xpose.msra.mxu0 0.0
        %357 = vmatprep.mubr.f32.mxu0 0.0
        %358 = vmatmul.mubr.f32.gmra.mrb[0].mxu0 %v289
        %v359 = vpop.f32.mrb[0].mxu0
        %v360 = vadd.f32 0.0, %v359
        %v361 = vpop.f32.mrb[0].mxu0
        %362 = vdwg.mxu0
        %v363 = vsel %vm288, %v360, -inf
        %364 = vmax.xlane.f32.xlu0 %v363
        %v365 = vpop.xlane.xlu0 %364
        %v366 = vsub.f32 %v360, %v365
        %v367 = vmul.f32 %v366, 1.442695
        %v368 = vpow.pop %v367
        %v369 = vsel %vm288, %v368, 0.0
        %370 = vadd.xlane.f32.xlu0 %v369
        %v371 = vpop.xlane.xlu0 %370
        %v372 = vrcp.pop %v371
        %v373 = vmul.f32 %v368, %v372
        %374 = vrot.lane.b32.xlu0 %v282, 96
        %v375 = vpop.permute.xlu0 %374
        %v378 = vsel %vm288, %v373, 0
        %380 = vmatprep.subr.mxu0 0.0
        %381 = vmatpush1.msra.mxu0 %v375
        %382 = vmatprep.subr.mxu0 0.0
        %383 = vmatpush1.msra.mxu0 0.0
        %384 = vmatprep.subr.mxu0 0.0
        %385 = vmatpush1.msra.mxu0 0.0
        %386 = vmatprep.subr.mxu0 0.0
        %387 = vmatpush1.msra.mxu0 0.0
        %388 = vmatprep.subr.mxu0 0.0
        %389 = vmatpush1.msra.mxu0 0.0
        %390 = vmatprep.subr.mxu0 0.0
        %391 = vmatpush1.msra.mxu0 0.0
        %392 = vmatprep.subr.mxu0 0.0
        %393 = vmatpush1.msra.mxu0 0.0
        %394 = vmatprep.subr.mxu0 0.0
        %395 = vmatpush1.msra.mxu0 0.0
        %396 = vmatprep.subr.mxu0 0.0
        %397 = vmatpush1.msra.mxu0 0.0
        %398 = vmatprep.subr.mxu0 0.0
        %399 = vmatpush1.msra.mxu0 0.0
        %400 = vmatprep.subr.mxu0 0.0
        %401 = vmatpush1.msra.mxu0 0.0
        %402 = vmatprep.subr.mxu0 0.0
        %403 = vmatpush1.msra.mxu0 0.0
        %404 = vmatprep.subr.mxu0 0.0
        %405 = vmatpush1.msra.mxu0 0.0
        %406 = vmatprep.subr.mxu0 0.0
        %407 = vmatpush1.msra.mxu0 0.0
        %408 = vmatprep.subr.mxu0 0.0
        %409 = vmatpush1.msra.mxu0 0.0
        %410 = vmatprep.subr.mxu0 0.0
        %411 = vmatpush1.msra.mxu0 0.0
        %412 = vmatprep.subr.mxu0 0.0
        %413 = vmatpush1.msra.mxu0 0.0
        %414 = vmatprep.subr.mxu0 0.0
        %415 = vmatpush1.msra.mxu0 0.0
        %416 = vmatprep.subr.mxu0 0.0
        %417 = vmatpush1.msra.mxu0 0.0
        %418 = vmatprep.subr.mxu0 0.0
        %419 = vmatpush1.msra.mxu0 0.0
        %420 = vmatprep.subr.mxu0 0.0
        %421 = vmatpush1.msra.mxu0 0.0
        %422 = vmatprep.subr.mxu0 0.0
        %423 = vmatpush1.msra.mxu0 0.0
        %424 = vmatprep.subr.mxu0 0.0
        %425 = vmatpush1.msra.mxu0 0.0
        %426 = vmatprep.subr.mxu0 0.0
        %427 = vmatpush1.msra.mxu0 0.0
        %428 = vmatprep.subr.mxu0 0.0
        %429 = vmatpush1.msra.mxu0 0.0
        %430 = vmatprep.subr.mxu0 0.0
        %431 = vmatpush1.msra.mxu0 0.0
        %432 = vmatprep.subr.mxu0 0.0
        %433 = vmatpush1.msra.mxu0 0.0
        %434 = vmatprep.subr.mxu0 0.0
        %435 = vmatpush1.msra.mxu0 0.0
        %436 = vmatprep.subr.mxu0 0.0
        %437 = vmatpush1.msra.mxu0 0.0
        %438 = vmatprep.subr.mxu0 0.0
        %439 = vmatpush1.msra.mxu0 0.0
        %440 = vmatprep.subr.mxu0 0.0
        %441 = vmatpush1.msra.mxu0 0.0
        %442 = vmatprep.subr.mxu0 0.0
        %443 = vmatpush1.msra.mxu0 0.0
        %444 = vmatprep.mubr.f32.mxu0 0.0
        %445 = vmatmul.mubr.f32.gmra.mrb[0].mxu0 %v378
        %v446 = vpop.f32.mrb[0].mxu0
        %v447 = vadd.f32 0.0, %v446
        %v448 = vpop.f32.mrb[0].mxu0
        %449 = vdwg.mxu0
        %450 = vrot.lane.b32.xlu0 %v282, 120
        %v451 = vpop.permute.xlu0 %450
        %452 = vrot.lane.b32.xlu0 %v282, 104
        %v453 = vpop.permute.xlu0 %452
        %v454 = vsel %vm288, %v451, 0
        %v456 = vsel %vm288, %v453, 0
        %458 = vmatprep.subr.mxu0 0.0
        %459 = vmatpush1.xpose.msra.mxu0 %v456
        %460 = vmatprep.subr.mxu0 0.0
        %461 = vmatpush1.xpose.msra.mxu0 0.0
        %462 = vmatprep.subr.mxu0 0.0
        %463 = vmatpush1.xpose.msra.mxu0 0.0
        %464 = vmatprep.subr.mxu0 0.0
        %465 = vmatpush1.xpose.msra.mxu0 0.0
        %466 = vmatprep.subr.mxu0 0.0
        %467 = vmatpush1.xpose.msra.mxu0 0.0
        %468 = vmatprep.subr.mxu0 0.0
        %469 = vmatpush1.xpose.msra.mxu0 0.0
        %470 = vmatprep.subr.mxu0 0.0
        %471 = vmatpush1.xpose.msra.mxu0 0.0
        %472 = vmatprep.subr.mxu0 0.0
        %473 = vmatpush1.xpose.msra.mxu0 0.0
        %474 = vmatprep.subr.mxu0 0.0
        %475 = vmatpush1.xpose.msra.mxu0 0.0
        %476 = vmatprep.subr.mxu0 0.0
        %477 = vmatpush1.xpose.msra.mxu0 0.0
        %478 = vmatprep.subr.mxu0 0.0
        %479 = vmatpush1.xpose.msra.mxu0 0.0
        %480 = vmatprep.subr.mxu0 0.0
        %481 = vmatpush1.xpose.msra.mxu0 0.0
        %482 = vmatprep.subr.mxu0 0.0
        %483 = vmatpush1.xpose.msra.mxu0 0.0
        %484 = vmatprep.subr.mxu0 0.0
        %485 = vmatpush1.xpose.msra.mxu0 0.0
        %486 = vmatprep.subr.mxu0 0.0
        %487 = vmatpush1.xpose.msra.mxu0 0.0
        %488 = vmatprep.subr.mxu0 0.0
        %489 = vmatpush1.xpose.msra.mxu0 0.0
        %490 = vmatprep.subr.mxu0 0.0
        %491 = vmatpush1.xpose.msra.mxu0 0.0
        %492 = vmatprep.subr.mxu0 0.0
        %493 = vmatpush1.xpose.msra.mxu0 0.0
        %494 = vmatprep.subr.mxu0 0.0
        %495 = vmatpush1.xpose.msra.mxu0 0.0
        %496 = vmatprep.subr.mxu0 0.0
        %497 = vmatpush1.xpose.msra.mxu0 0.0
        %498 = vmatprep.subr.mxu0 0.0
        %499 = vmatpush1.xpose.msra.mxu0 0.0
        %500 = vmatprep.subr.mxu0 0.0
        %501 = vmatpush1.xpose.msra.mxu0 0.0
        %502 = vmatprep.subr.mxu0 0.0
        %503 = vmatpush1.xpose.msra.mxu0 0.0
        %504 = vmatprep.subr.mxu0 0.0
        %505 = vmatpush1.xpose.msra.mxu0 0.0
        %506 = vmatprep.subr.mxu0 0.0
        %507 = vmatpush1.xpose.msra.mxu0 0.0
        %508 = vmatprep.subr.mxu0 0.0
        %509 = vmatpush1.xpose.msra.mxu0 0.0
        %510 = vmatprep.subr.mxu0 0.0
        %511 = vmatpush1.xpose.msra.mxu0 0.0
        %512 = vmatprep.subr.mxu0 0.0
        %513 = vmatpush1.xpose.msra.mxu0 0.0
        %514 = vmatprep.subr.mxu0 0.0
        %515 = vmatpush1.xpose.msra.mxu0 0.0
        %516 = vmatprep.subr.mxu0 0.0
        %517 = vmatpush1.xpose.msra.mxu0 0.0
        %518 = vmatprep.subr.mxu0 0.0
        %519 = vmatpush1.xpose.msra.mxu0 0.0
        %520 = vmatprep.subr.mxu0 0.0
        %521 = vmatpush1.xpose.msra.mxu0 0.0
        %522 = vmatprep.mubr.f32.mxu0 0.0
        %523 = vmatmul.mubr.f32.gmra.mrb[0].mxu0 %v454
        %v524 = vpop.f32.mrb[0].mxu0
        %v525 = vadd.f32 0.0, %v524
        %v526 = vpop.f32.mrb[0].mxu0
        %527 = vdwg.mxu0
        %v528 = vsel %vm288, %v525, -inf
        %529 = vmax.xlane.f32.xlu0 %v528
        %v530 = vpop.xlane.xlu0 %529
        %v531 = vsub.f32 %v525, %v530
        %v532 = vmul.f32 %v531, 1.442695
        %v533 = vpow.pop %v532
        %v534 = vsel %vm288, %v533, 0.0
        %535 = vadd.xlane.f32.xlu0 %v534
        %v536 = vpop.xlane.xlu0 %535
        %v537 = vrcp.pop %v536
        %v538 = vmul.f32 %v533, %v537
        %539 = vrot.lane.b32.xlu0 %v282, 88
        %v540 = vpop.permute.xlu0 %539
        %v543 = vsel %vm288, %v538, 0
        %545 = vmatprep.subr.mxu0 0.0
        %546 = vmatpush1.msra.mxu0 %v540
        %547 = vmatprep.subr.mxu0 0.0
        %548 = vmatpush1.msra.mxu0 0.0
        %549 = vmatprep.subr.mxu0 0.0
        %550 = vmatpush1.msra.mxu0 0.0
        %551 = vmatprep.subr.mxu0 0.0
        %552 = vmatpush1.msra.mxu0 0.0
        %553 = vmatprep.subr.mxu0 0.0
        %554 = vmatpush1.msra.mxu0 0.0
        %555 = vmatprep.subr.mxu0 0.0
        %556 = vmatpush1.msra.mxu0 0.0
        %557 = vmatprep.subr.mxu0 0.0
        %558 = vmatpush1.msra.mxu0 0.0
        %559 = vmatprep.subr.mxu0 0.0
        %560 = vmatpush1.msra.mxu0 0.0
        %561 = vmatprep.subr.mxu0 0.0
        %562 = vmatpush1.msra.mxu0 0.0
        %563 = vmatprep.subr.mxu0 0.0
        %564 = vmatpush1.msra.mxu0 0.0
        %565 = vmatprep.subr.mxu0 0.0
        %566 = vmatpush1.msra.mxu0 0.0
        %567 = vmatprep.subr.mxu0 0.0
        %568 = vmatpush1.msra.mxu0 0.0
        %569 = vmatprep.subr.mxu0 0.0
        %570 = vmatpush1.msra.mxu0 0.0
        %571 = vmatprep.subr.mxu0 0.0
        %572 = vmatpush1.msra.mxu0 0.0
        %573 = vmatprep.subr.mxu0 0.0
        %574 = vmatpush1.msra.mxu0 0.0
        %575 = vmatprep.subr.mxu0 0.0
        %576 = vmatpush1.msra.mxu0 0.0
        %577 = vmatprep.subr.mxu0 0.0
        %578 = vmatpush1.msra.mxu0 0.0
        %579 = vmatprep.subr.mxu0 0.0
        %580 = vmatpush1.msra.mxu0 0.0
        %581 = vmatprep.subr.mxu0 0.0
        %582 = vmatpush1.msra.mxu0 0.0
        %583 = vmatprep.subr.mxu0 0.0
        %584 = vmatpush1.msra.mxu0 0.0
        %585 = vmatprep.subr.mxu0 0.0
        %586 = vmatpush1.msra.mxu0 0.0
        %587 = vmatprep.subr.mxu0 0.0
        %588 = vmatpush1.msra.mxu0 0.0
        %589 = vmatprep.subr.mxu0 0.0
        %590 = vmatpush1.msra.mxu0 0.0
        %591 = vmatprep.subr.mxu0 0.0
        %592 = vmatpush1.msra.mxu0 0.0
        %593 = vmatprep.subr.mxu0 0.0
        %594 = vmatpush1.msra.mxu0 0.0
        %595 = vmatprep.subr.mxu0 0.0
        %596 = vmatpush1.msra.mxu0 0.0
        %597 = vmatprep.subr.mxu0 0.0
        %598 = vmatpush1.msra.mxu0 0.0
        %599 = vmatprep.subr.mxu0 0.0
        %600 = vmatpush1.msra.mxu0 0.0
        %601 = vmatprep.subr.mxu0 0.0
        %602 = vmatpush1.msra.mxu0 0.0
        %603 = vmatprep.subr.mxu0 0.0
        %604 = vmatpush1.msra.mxu0 0.0
        %605 = vmatprep.subr.mxu0 0.0
        %606 = vmatpush1.msra.mxu0 0.0
        %607 = vmatprep.subr.mxu0 0.0
        %608 = vmatpush1.msra.mxu0 0.0
        %609 = vmatprep.mubr.f32.mxu0 0.0
        %610 = vmatmul.mubr.f32.gmra.mrb[0].mxu0 %v543
        %v611 = vpop.f32.mrb[0].mxu0
        %v612 = vadd.f32 0.0, %v611
        %v613 = vpop.f32.mrb[0].mxu0
        %614 = vdwg.mxu0
        %616 = vrot.lane.b32.xlu0 %v612, 8
        %v617 = vpop.permute.xlu0 %616
        %v619 = vsel %vm288, %v447, %v617
        %622 = vrot.lane.b32.xlu0 %v202, 80
        %v623 = vpop.permute.xlu0 %622
        %624 = vrot.lane.b32.xlu0 %v203, 80
        %v625 = vpop.permute.xlu0 %624
        %628 = vrot.lane.b32.xlu0 %v209, 80
        %v629 = vpop.permute.xlu0 %628
        %v632 = vsel %vm211, %v619, 0
        %634 = vmatprep.subr.mxu0 0.0
        %635 = vmatpush1.msra.mxu0 %v623
        %636 = vmatprep.subr.mxu0 0.0
        %637 = vmatpush1.msra.mxu0 %v625
        %638 = vmatprep.subr.mxu0 0.0
        %639 = vmatpush1.msra.mxu0 0.0
        %640 = vmatprep.subr.mxu0 0.0
        %641 = vmatpush1.msra.mxu0 0.0
        %642 = vmatprep.subr.mxu0 0.0
        %643 = vmatpush1.msra.mxu0 0.0
        %644 = vmatprep.subr.mxu0 0.0
        %645 = vmatpush1.msra.mxu0 0.0
        %646 = vmatprep.subr.mxu0 0.0
        %647 = vmatpush1.msra.mxu0 0.0
        %648 = vmatprep.subr.mxu0 0.0
        %649 = vmatpush1.msra.mxu0 0.0
        %650 = vmatprep.subr.mxu0 0.0
        %651 = vmatpush1.msra.mxu0 0.0
        %652 = vmatprep.subr.mxu0 0.0
        %653 = vmatpush1.msra.mxu0 0.0
        %654 = vmatprep.subr.mxu0 0.0
        %655 = vmatpush1.msra.mxu0 0.0
        %656 = vmatprep.subr.mxu0 0.0
        %657 = vmatpush1.msra.mxu0 0.0
        %658 = vmatprep.subr.mxu0 0.0
        %659 = vmatpush1.msra.mxu0 0.0
        %660 = vmatprep.subr.mxu0 0.0
        %661 = vmatpush1.msra.mxu0 0.0
        %662 = vmatprep.subr.mxu0 0.0
        %663 = vmatpush1.msra.mxu0 0.0
        %664 = vmatprep.subr.mxu0 0.0
        %665 = vmatpush1.msra.mxu0 0.0
        %666 = vmatprep.subr.mxu0 0.0
        %667 = vmatpush1.msra.mxu0 0.0
        %668 = vmatprep.subr.mxu0 0.0
        %669 = vmatpush1.msra.mxu0 0.0
        %670 = vmatprep.subr.mxu0 0.0
        %671 = vmatpush1.msra.mxu0 0.0
        %672 = vmatprep.subr.mxu0 0.0
        %673 = vmatpush1.msra.mxu0 0.0
        %674 = vmatprep.subr.mxu0 0.0
        %675 = vmatpush1.msra.mxu0 0.0
        %676 = vmatprep.subr.mxu0 0.0
        %677 = vmatpush1.msra.mxu0 0.0
        %678 = vmatprep.subr.mxu0 0.0
        %679 = vmatpush1.msra.mxu0 0.0
        %680 = vmatprep.subr.mxu0 0.0
        %681 = vmatpush1.msra.mxu0 0.0
        %682 = vmatprep.subr.mxu0 0.0
        %683 = vmatpush1.msra.mxu0 0.0
        %684 = vmatprep.subr.mxu0 0.0
        %685 = vmatpush1.msra.mxu0 0.0
        %686 = vmatprep.subr.mxu0 0.0
        %687 = vmatpush1.msra.mxu0 0.0
        %688 = vmatprep.subr.mxu0 0.0
        %689 = vmatpush1.msra.mxu0 0.0
        %690 = vmatprep.subr.mxu0 0.0
        %691 = vmatpush1.msra.mxu0 0.0
        %692 = vmatprep.subr.mxu0 0.0
        %693 = vmatpush1.msra.mxu0 0.0
        %694 = vmatprep.subr.mxu0 0.0
        %695 = vmatpush1.msra.mxu0 0.0
        %696 = vmatprep.subr.mxu0 0.0
        %697 = vmatpush1.msra.mxu0 0.0
        %698 = vmatprep.mubr.f32.mxu0 0.0
        %699 = vmatmul.mubr.f32.gmra.mrb[0].mxu0 %v632
        %v700 = vpop.f32.mrb[0].mxu0
        %v701 = vadd.f32 %v629, %v700
        %v702 = vpop.f32.mrb[0].mxu0
        %703 = vdwg.mxu0
        %v704 = vadd.f32 %v701, %v201
        %v705 = vsel %vm211, %v704, 0.0
        %706 = vadd.xlane.f32.xlu0 %v705
        %v707 = vpop.xlane.xlu0 %706
        %v708 = vrcp.pop 16.0
        %v709 = vmul.f32 %v707, %v708
        %v710 = vmul.f32 %v704, %v704
        %v711 = vsel %vm211, %v710, 0.0
        %712 = vadd.xlane.f32.xlu0 %v711
        %v713 = vpop.xlane.xlu0 %712
        %v714 = vmul.f32 %v713, %v708
        %v715 = vmul.f32 %v709, %v709
        %v716 = vsub.f32 %v714, %v715
        %v717 = vsub.f32 %v704, %v709
        %v718 = vadd.f32 %v716, 1e-12
        %v719 = vrsqrt.pop %v718
        %v720 = vmul.f32 %v717, %v719
        %721 = vrot.lane.b32.xlu0 %v209, 64
        %v722 = vpop.permute.xlu0 %721
        %v724 = vmul.f32 %v720, %v722
        %725 = vrot.lane.b32.xlu0 %v209, 48
        %v726 = vpop.permute.xlu0 %725
        %v728 = vadd.f32 %v724, %v726
        %729 = vst.msk [vmem:[%s200] sm:$0xff] %vm211, %v728
        %s730 = sand.u32 %s97, 1
        %s731 = scalar_lea.sflag [#allocation4], %s730
        %s732 = sand.u32 %s97, 1
        %s733 = smul.addr %s732, 8
        %s734 = scalar_lea.vmem [#allocation7], %s733
        // Predicated region
        $region41: #{tpu_custom_call.1} parent=31 // pred_check
          %p735 = pneg %p107
        $region42: #{tpu_custom_call.1} parent=31 // pred_check_branch
          %737 = sbr.rel (%p735) target = $region44
        $region43: #{tpu_custom_call.1} parent=31 // pred_region
          %s739 = ssub.s32 128, 128
          %740 = vsyncadd %s731, %s739
          %s741 = smul.addr %s21, 128
          %s742 = scalar_lea.hbm %s3, %s741
          %s744 = sshll.u32 %s734, 4
          %s745 = int_to_ptr.vmem [resolvable:$true] %s744
          %747 = dma.vmem_to_hbm [thread:$0]  %s745, 128, %s742, %s731
        $region44: #{tpu_custom_call.1} parent=31 // pred_fallthru
          _
      $region32: #{tpu_custom_call.1} parent=5 // pred_fallthru
        _
      %p748 = scmp.le.s32.totalorder 2, %s16
      // Predicated region
      $region45: #{tpu_custom_call.1} parent=5 // pred_check
        %p749 = pneg %p748
      $region46: #{tpu_custom_call.1} parent=5 // pred_check_branch
        %751 = sbr.rel (%p749) target = $region48
      $region47: #{tpu_custom_call.1} parent=5 // pred_region
        %s752 = ssub.s32 %s16, 2
        // Predicated region
        $region49: #{tpu_custom_call.1} parent=47 // pred_check
          %p753 = pneg %p113
        $region50: #{tpu_custom_call.1} parent=47 // pred_check_branch
          %755 = sbr.rel (%p753) target = $region52
        $region51: #{tpu_custom_call.1} parent=47 // pred_region
          %s756 = sand.u32 %s98, 1
          %s757 = scalar_lea.sflag [#allocation4], %s756
          %s758 = sand.u32 %s98, 1
          %s759 = smul.addr %s758, 8
          %s760 = scalar_lea.vmem [#allocation7], %s759
          %761 = dma.done %s757, 128
        $region52: #{tpu_custom_call.1} parent=47 // pred_fallthru
          _
      $region48: #{tpu_custom_call.1} parent=5 // pred_fallthru
        _
    $region6: #{tpu_custom_call.1} parent=1 // loop_footer
      %s20 = sadd.s32 1, %s16
    $region7: #{tpu_custom_call.1} parent=1 // loop_footer_branch
      %15 = sbr.rel target = $region3
    $region8: #{tpu_custom_call.1} parent=1 // loop_exit
      _
    %762 = vsyncpa [#allocation3], 1
    %s763 = scalar_lea.sflag [#allocation3], 1
    %764 = vsyncpa %s763, 1
    %765 = vsyncpa [#allocation6], 1
    %766 = vsyncpa [#allocation4], 1
    %s767 = scalar_lea.sflag [#allocation4], 1
    %768 = vsyncpa %s767, 1

</llo_original>
